<compile_context>
chip_gen: v5e
topology: v5e:2x2
jax: 0.10.0
libtpu: 0.0.40
codegen_flags: <defaults>
</compile_context>

<pallas_src>
import functools

import jax
import jax.numpy as jnp
from jax.experimental import pallas as pl
from jax.experimental.pallas import tpu as pltpu


def conv_bn_act_kernel(x_ref, w_ref, bias_ref, lab_ref, o_ref,
                       *, KH, H, use_act, use_lab):
    # x_ref:    (Nb, H + KH - 1, W*Cin)   vertically pre-padded, lane-dense
    # w_ref:    (KH*W*Cin, W*Cout)        banded conv weights, BN scale folded
    # bias_ref: (1, W*Cout)               folded BN bias, tiled across W (f32)
    # lab_ref:  (2,) in SMEM              [lab_scale, lab_bias]
    # o_ref:    (Nb, H, W*Cout)           lane-dense output (W*Cout = 128 here)
    Nb = o_ref.shape[0]
    WCout = o_ref.shape[2]

    # Build the LHS: for each image, the KH vertically-shifted (H, W*Cin)
    # views are concatenated along the lane (contraction) axis -> (H, KH*W*Cin)
    # = (16, 192).  Multiple images (Nb > 1) stack along M.
    rows = []
    for nb in range(Nb):                              # static, tiny
        xp = x_ref[nb]                                # (H+KH-1, W*Cin)
        taps = [xp[ky:ky + H, :] for ky in range(KH)]  # static sublane slices
        rows.append(jnp.concatenate(taps, axis=-1))   # (H, KH*W*Cin)
    lhs = rows[0] if Nb == 1 else jnp.concatenate(rows, axis=0)  # (Nb*H, KH*W*Cin)

    # One MXU matmul: (Nb*H, KH*W*Cin) x (KH*W*Cin, W*Cout), f32 accumulate.
    acc = jnp.dot(lhs, w_ref[...], preferred_element_type=jnp.float32)

    # Epilogue in f32 (v5e has no bf16 VPU): BN bias, ReLU, LearnableAffine.
    y = acc + bias_ref[...]
    if use_act:
        y = jnp.maximum(y, 0.0)                       # ReLU
        if use_lab:
            y = lab_ref[0] * y + lab_ref[1]           # LearnableAffineBlock
        # NOTE: LAB only applies when use_act=True, matching the PyTorch
        # ConvBNAct.forward control flow.
    o_ref[...] = y.reshape(Nb, H, WCout).astype(o_ref.dtype)  # full 128-lane vst


def _banded_conv_weights(weight_oihw, bn_scale, W, pad):
    """Build (KH*W*Cin, W*Cout) banded weights with BN scale folded in.

    B[ky*W*Cin + w_in*Cin + ci, w_out*Cout + co]
        = weight[co, ci, ky, w_in - w_out + pad] * bn_scale[co]
    (zero outside the valid KW band) — encodes the KW taps and the horizontal
    SAME padding; the KH taps live on the contraction axis so the whole conv
    is a single matmul against the tap-concatenated LHS.
    """
    Cout, Cin, KH, KW = weight_oihw.shape
    w_fold = weight_oihw * bn_scale[:, None, None, None]       # fold BN scale
    w_t = jnp.transpose(w_fold, (2, 3, 1, 0))                  # (KH, KW, Cin, Cout)
    w_in = jnp.arange(W)
    w_out = jnp.arange(W)
    kx = w_in[:, None] - w_out[None, :] + pad                  # (W, W)
    valid = (kx >= 0) & (kx < KW)
    kx_c = jnp.clip(kx, 0, KW - 1)
    band = w_t[:, kx_c, :, :]                                  # (KH, Win, Wout, Cin, Cout)
    band = jnp.where(valid[None, :, :, None, None], band, 0.0)
    band = jnp.transpose(band, (0, 1, 3, 2, 4))                # (KH, Win, Cin, Wout, Cout)
    return band.reshape(KH * W * Cin, W * Cout)


def prepare_conv_bn_act_params(weight_oihw, bn_gamma, bn_beta, bn_mean, bn_var,
                               lab_scale, lab_bias, *, W, eps=1e-5,
                               compute_dtype=jnp.bfloat16):
    """Parameter-only preprocessing (hoisted out of the per-call path)."""
    Cout, Cin, KH, KW = weight_oihw.shape
    pad = (KH - 1) // 2
    bn_scale = bn_gamma / jnp.sqrt(bn_var + eps)
    bn_bias = bn_beta - bn_mean * bn_scale
    w_flat = _banded_conv_weights(weight_oihw, bn_scale, W, pad).astype(compute_dtype)
    bias_tiled = jnp.tile(bn_bias, W).reshape(1, W * Cout).astype(jnp.float32)
    lab = jnp.array([lab_scale, lab_bias], dtype=jnp.float32)
    return w_flat, bias_tiled, lab


def conv_bn_act_apply(x_nchw, params, *, stride=1, use_act=True, use_lab=True,
                      images_per_block=1):
    """PyTorch-layout input -> lane-dense Pallas kernel -> NCHW output.

    images_per_block=1  : grid=(N,), 2 parallel steps -> both v7x TCs busy.
    images_per_block=N  : grid=(1,), one (N*H, K) matmul -> best for 1-TC chips.
    """
    assert stride == 1, "kernel implements the module defaults (stride=1, groups=1)"
    w_flat, bias_tiled, lab = params
    N, Cin, H, W = x_nchw.shape
    WCin = W * Cin
    WCout = bias_tiled.shape[1]
    Cout = WCout // W
    KH = w_flat.shape[0] // WCin
    pad = (KH - 1) // 2
    Nb = images_per_block
    assert N % Nb == 0
    compute_dtype = w_flat.dtype

    # NCHW -> lane-dense (N, H, W*Cin); pad vertically once (H -> H + 2*pad)
    # so per-tap shifts in the kernel are static sublane slices; cast the MXU
    # operand once here (halves input DMA for bf16).
    x_nhwc = jnp.transpose(x_nchw, (0, 2, 3, 1))
    x2d = x_nhwc.reshape(N, H, WCin)
    x_pad = jnp.pad(x2d, ((0, 0), (pad, pad), (0, 0))).astype(compute_dtype)
    Hp = H + 2 * pad

    kernel = functools.partial(conv_bn_act_kernel, KH=KH, H=H,
                               use_act=use_act, use_lab=use_lab)

    out2d = pl.pallas_call(
        kernel,
        out_shape=jax.ShapeDtypeStruct((N, H, WCout), x_nchw.dtype),
        grid_spec=pltpu.PrefetchScalarGridSpec(
            num_scalar_prefetch=0,
            grid=(N // Nb,),
            in_specs=[
                pl.BlockSpec((Nb, Hp, WCin), lambda n: (n, 0, 0)),
                pl.BlockSpec((KH * WCin, WCout), lambda n: (0, 0)),
                pl.BlockSpec((1, WCout), lambda n: (0, 0)),
                pl.BlockSpec(memory_space=pltpu.MemorySpace.SMEM),
            ],
            out_specs=pl.BlockSpec((Nb, H, WCout), lambda n: (n, 0, 0)),
        ),
        compiler_params=pltpu.CompilerParams(
            dimension_semantics=("parallel",)),
    )(x_pad, w_flat, bias_tiled, lab)

    # Lane-dense (N, H, W*Cout) -> NCHW to match the PyTorch output layout.
    out_nhwc = out2d.reshape(N, H, W, Cout)
    return jnp.transpose(out_nhwc, (0, 3, 1, 2))


def _reference(x_nchw, weight_oihw, bn_gamma, bn_beta, bn_mean, bn_var,
               lab_scale, lab_bias, eps=1e-5):
    """Pure-JAX reference for correctness check."""
    pad = (weight_oihw.shape[2] - 1) // 2
    x_nhwc = jnp.transpose(x_nchw, (0, 2, 3, 1))
    w_hwio = jnp.transpose(weight_oihw, (2, 3, 1, 0))
    y = jax.lax.conv_general_dilated(
        x_nhwc, w_hwio, window_strides=(1, 1),
        padding=((pad, pad), (pad, pad)),
        dimension_numbers=("NHWC", "HWIO", "NHWC"))
    scale = bn_gamma / jnp.sqrt(bn_var + eps)
    bias = bn_beta - bn_mean * scale
    y = y * scale + bias
    y = jnp.maximum(y, 0.0)
    y = lab_scale * y + lab_bias
    return jnp.transpose(y, (0, 3, 1, 2))


if __name__ == "__main__":
    # Module config: ConvBNAct(in_channels=4, out_channels=8, kernel_size=3,
    #                          stride=1, padding=1, use_act=True, use_lab=True)
    N, Cin, H, W = 2, 4, 16, 16
    Cout, K = 8, 3

    key = jax.random.PRNGKey(0)
    kx_, kw_, kg, kb, km, kv = jax.random.split(key, 6)

    x = jax.random.normal(kx_, (N, Cin, H, W), dtype=jnp.float32)
    weight = jax.random.normal(kw_, (Cout, Cin, K, K), dtype=jnp.float32) * 0.1
    bn_gamma = 1.0 + 0.1 * jax.random.normal(kg, (Cout,), dtype=jnp.float32)
    bn_beta = 0.1 * jax.random.normal(kb, (Cout,), dtype=jnp.float32)
    bn_mean = 0.05 * jax.random.normal(km, (Cout,), dtype=jnp.float32)
    bn_var = jnp.abs(1.0 + 0.1 * jax.random.normal(kv, (Cout,), dtype=jnp.float32))
    lab_scale, lab_bias = 1.2, 0.1   # non-trivial LAB to actually exercise it

    ref = _reference(x, weight, bn_gamma, bn_beta, bn_mean, bn_var,
                     lab_scale, lab_bias)

    # bf16 MXU operands (native path on v5e/v6e/v7x), f32 accumulate + epilogue.
    params_bf16 = prepare_conv_bn_act_params(
        weight, bn_gamma, bn_beta, bn_mean, bn_var, lab_scale, lab_bias,
        W=W, compute_dtype=jnp.bfloat16)

    # Nb=1: grid=(2,) parallel — both v7x TensorCores get a step.
    out = conv_bn_act_apply(x, params_bf16, images_per_block=1)
    out = jax.block_until_ready(out)
    assert out.shape == (N, Cout, H, W)
    assert jnp.allclose(out, ref, atol=5e-2, rtol=5e-2), "bf16 Nb=1 mismatch"

    # Nb=N: grid=(1,), batch folded into M (one (32,192)x(192,128) matmul) —
    # amortizes per-step overhead on single-TC chips (v5e/v6e).
    out_b = conv_bn_act_apply(x, params_bf16, images_per_block=N)
    out_b = jax.block_until_ready(out_b)
    assert jnp.allclose(out_b, ref, atol=5e-2, rtol=5e-2), "bf16 Nb=N mismatch"

    # f32 MXU path — tight correctness check against the reference.
    params_f32 = prepare_conv_bn_act_params(
        weight, bn_gamma, bn_beta, bn_mean, bn_var, lab_scale, lab_bias,
        W=W, compute_dtype=jnp.float32)
    out_f32 = conv_bn_act_apply(x, params_f32, images_per_block=1)
    out_f32 = jax.block_until_ready(out_f32)
    assert jnp.allclose(out_f32, ref, atol=1e-4, rtol=1e-4), "f32 mismatch"

    print("KERNEL_OK")
</pallas_src>

<mosaic_0001>
module attributes {stable_mosaic.version = 11 : i64} {
  func.func @conv_bn_act_kernel(%arg0: i32, %arg1: memref<1x18x64xbf16, #tpu.memory_space<vmem>>, %arg2: memref<192x128xbf16, #tpu.memory_space<vmem>>, %arg3: memref<1x128xf32, #tpu.memory_space<vmem>>, %arg4: memref<2xf32, #tpu.memory_space<smem>>, %arg5: memref<1x16x128xf32, #tpu.memory_space<vmem>>) attributes {dimension_semantics = [#tpu.dimension_semantics<parallel>], iteration_bounds = array<i64: 2>, scalar_prefetch = 0 : i64, scratch_operands = 0 : i64, tpu.core_type = #tpu.core_type<tc>, window_params = [{transform_indices = @transform_0, window_bounds = array<i64: 1, 18, 64>}, {pipeline_mode = #tpu.pipeline_mode<synchronous>, transform_indices = @transform_1, window_bounds = array<i64: 192, 128>}, {pipeline_mode = #tpu.pipeline_mode<synchronous>, transform_indices = @transform_2, window_bounds = array<i64: 1, 128>}, {transform_indices = @transform_3, window_bounds = array<i64: 2>}, {transform_indices = @transform_4, window_bounds = array<i64: 1, 16, 128>}]} {
    %c0 = arith.constant 0 : index
    %c0_0 = arith.constant 0 : index
    %c0_1 = arith.constant 0 : index
    %0 = vector.load %arg1[%c0, %c0_0, %c0_1] : memref<1x18x64xbf16, #tpu.memory_space<vmem>>, vector<1x18x64xbf16>
    %1 = vector.shape_cast %0 : vector<1x18x64xbf16> to vector<18x64xbf16>
    %2 = vector.extract_strided_slice %1 {offsets = [0, 0], sizes = [16, 64], strides = [1, 1]} : vector<18x64xbf16> to vector<16x64xbf16>
    %3 = vector.extract_strided_slice %1 {offsets = [1, 0], sizes = [16, 64], strides = [1, 1]} : vector<18x64xbf16> to vector<16x64xbf16>
    %4 = vector.extract_strided_slice %1 {offsets = [2, 0], sizes = [16, 64], strides = [1, 1]} : vector<18x64xbf16> to vector<16x64xbf16>
    %5 = tpu.concatenate %2, %3, %4 in 1 : vector<16x64xbf16>, vector<16x64xbf16>, vector<16x64xbf16> -> vector<16x192xbf16>
    %c0_2 = arith.constant 0 : index
    %c0_3 = arith.constant 0 : index
    %6 = vector.load %arg2[%c0_2, %c0_3] : memref<192x128xbf16, #tpu.memory_space<vmem>>, vector<192x128xbf16>
    %cst = arith.constant dense<0.000000e+00> : vector<16x128xf32>
    %7 = tpu.matmul %5, %6, %cst {dimension_numbers = #tpu.dot_dimension_numbers<[1], [0], [0], [1], [0, 0, 1, 1], [], []>} : vector<16x192xbf16>, vector<192x128xbf16>, vector<16x128xf32> -> vector<16x128xf32>
    %c0_4 = arith.constant 0 : index
    %c0_5 = arith.constant 0 : index
    %8 = vector.load %arg3[%c0_4, %c0_5] : memref<1x128xf32, #tpu.memory_space<vmem>>, vector<1x128xf32>
    %9 = vector.broadcast %8 : vector<1x128xf32> to vector<16x128xf32>
    %10 = arith.addf %7, %9 : vector<16x128xf32>
    %cst_6 = arith.constant 0.000000e+00 : f32
    %11 = vector.broadcast %cst_6 : f32 to vector<16x128xf32>
    %12 = arith.maximumf %10, %11 : vector<16x128xf32>
    %c0_7 = arith.constant 0 : index
    %13 = memref.load %arg4[%c0_7] : memref<2xf32, #tpu.memory_space<smem>>
    %14 = vector.broadcast %13 : f32 to vector<16x128xf32>
    %15 = arith.mulf %14, %12 : vector<16x128xf32>
    %c1 = arith.constant 1 : index
    %16 = memref.load %arg4[%c1] : memref<2xf32, #tpu.memory_space<smem>>
    %17 = vector.broadcast %16 : f32 to vector<16x128xf32>
    %18 = arith.addf %15, %17 : vector<16x128xf32>
    %19 = vector.shape_cast %18 : vector<16x128xf32> to vector<1x16x128xf32>
    %c0_8 = arith.constant 0 : index
    %c0_9 = arith.constant 0 : index
    %c0_10 = arith.constant 0 : index
    %20 = vector.load %arg5[%c0_8, %c0_9, %c0_10] : memref<1x16x128xf32, #tpu.memory_space<vmem>>, vector<1x16x128xf32>
    tpu.vector_store %arg5[%c0_8, %c0_9, %c0_10], %19 {strides = array<i32>} : memref<1x16x128xf32, #tpu.memory_space<vmem>>, vector<1x16x128xf32>,
    return
  }
  func.func @transform_0(%arg0: i32) -> (i32, i32, i32) {
    %c0_i32 = arith.constant 0 : i32
    %c0_i32_0 = arith.constant 0 : i32
    %c0_i32_1 = arith.constant 0 : i32
    return %arg0, %c0_i32, %c0_i32_0 : i32, i32, i32
  }
  func.func @transform_1(%arg0: i32) -> (i32, i32) {
    %c0_i32 = arith.constant 0 : i32
    %c0_i32_0 = arith.constant 0 : i32
    %c0_i32_1 = arith.constant 0 : i32
    return %c0_i32, %c0_i32_0 : i32, i32
  }
  func.func @transform_2(%arg0: i32) -> (i32, i32) {
    %c0_i32 = arith.constant 0 : i32
    %c0_i32_0 = arith.constant 0 : i32
    %c0_i32_1 = arith.constant 0 : i32
    return %c0_i32, %c0_i32_0 : i32, i32
  }
  func.func @transform_3(%arg0: i32) -> i32 {
    %c0_i32 = arith.constant 0 : i32
    %c0_i32_0 = arith.constant 0 : i32
    return %c0_i32 : i32
  }
  func.func @transform_4(%arg0: i32) -> (i32, i32, i32) {
    %c0_i32 = arith.constant 0 : i32
    %c0_i32_0 = arith.constant 0 : i32
    %c0_i32_1 = arith.constant 0 : i32
    return %arg0, %c0_i32, %c0_i32_0 : i32, i32, i32
  }
}

</mosaic_0001>

<llo_original>
// kernel: tpu_custom_call.1
$region0: #{tpu_custom_call.1}
  #allocation0 [shape = 'u32[]', space=smem, size = 0x4, offset = 0x4, fixed_abs, tag = 'smem constant byte address 0x4 - core index']
  #allocation1 [shape = 'u32[72,128]{1,0:T(1,128)}', space=vmem, size = 0x9000, scoped, tag = 'internal scratch']
  %s0 = inlined_call_operand.vmem [shape: bf16[2,18,64], index: 0, kind: input, shape index: {}]
  %s1 = inlined_call_operand.hbm [shape: bf16[192,128], index: 1, kind: input, shape index: {}]
  %s2 = inlined_call_operand.vmem [shape: f32[1,128], index: 2, kind: input, shape index: {}]
  %s3 = inlined_call_operand.vmem [shape: f32[2], index: 3, kind: input, shape index: {}]
  %s4 = inlined_call_operand.hbm [shape: f32[2,16,128], index: 4, kind: output, shape index: {}]
  %s5 = sld [smem:[#allocation0]]
  $region57: #{tpu_custom_call.1} parent=0
    _
  %s7 = ssub.s32 1, %s5
  %s8 = scalar_select 0, %s7, %s5
  $region1: #{tpu_custom_call.1} parent=0
    #allocation2 [shape = 'u8[49152]{0}', space=vmem, size = 0xc000, scoped, tag = 'input window, operand 1, single buffered']
    #allocation3 [shape = 's32[2]{0}', space=sflag, size = 0x8, scoped, tag = 'scoped memory for tpu_custom_call.1']
    #allocation4 [shape = 's32[2]{0}', space=sflag, size = 0x8, scoped, tag = 'scoped memory for tpu_custom_call.1']
    #allocation5 [shape = 's32[2]{0}', space=sflag, size = 0x8, scoped, tag = 'scoped memory for tpu_custom_call.1']
    #allocation6 [shape = 'u8[512]{0}', space=smem, size = 0x200, scoped, tag = 'input window, operand 3, single buffered']
    #allocation7 [shape = 'u8[16384]{0}', space=vmem, size = 0x4000, scoped, tag = 'output window, operand 0']
    %9 = vsyncpa [#allocation3], 0
    %10 = vsyncpa [#allocation5], 0
    %11 = vsyncpa [#allocation4], 0
    %s12 = scalar_lea.sflag [#allocation4], 1
    %13 = vsyncpa %s12, 0
    loop: start=0, step=1, limit=4
    $region2: #{tpu_custom_call.1} parent=1 // loop_pre_header
      _
    $region3: #{tpu_custom_call.1} parent=1 // loop_header
      %s15 = sphi 0, %s19
      %p16 = scmp.ge.s32.totalorder %s15, 4
      %s25 = sphi 0, %s27
      %s28 = sphi 0, %s25
      %s29 = sphi 0, %s28
      %s45 = sphi 0, %s29
      %s49 = sphi 0, %s49
      %s51 = sphi 0, %s49
      %s52 = sphi 0, %s51
      %s66 = sphi 0, %s52
      %s70 = sphi 0, %s70
      %s72 = sphi 0, %s70
      %s73 = sphi 0, %s72
      %s87 = sphi 0, %s73
      %s91 = sphi 0, %s91
      %s93 = sphi 0, %s91
      %s94 = sphi 0, %s93
      %s108 = sphi 0, %s94
      %s114 = sphi 0, %s116
      %s117 = sphi 0, %s114
      %s118 = sphi 0, %s117
      %s134 = sphi 0, %s118
    $region4: #{tpu_custom_call.1} parent=1 // loop_header_branch
      %18 = sbr.rel (%p16) target = $region8
    $region5: #{tpu_custom_call.1} parent=1 // loop_body
      %s20 = ssub.s32 %s15, 1
      %s21 = ssub.s32 %s15, 2
      %s22 = sadd.s32 %s15, 1
      %s23 = ssub.s32 %s15, %s22
      %p24 = scmp.eq.s32.totalorder %s23, 0
      %s26 = sadd.s32 %s25, 1
      %s27 = scalar_select %p24, %s25, %s26
      %p30 = pneg %p24
      %p31 = scmp.eq.s32.totalorder %s15, 1
      %p32 = por %p30, %p31
      %p33 = scmp.ne.s32.totalorder %s25, %s28
      %p34 = scmp.eq.s32.totalorder %s15, 0
      %p35 = por %p33, %p34
      %p36 = scmp.ne.s32.totalorder %s25, %s28
      %p37 = scmp.eq.s32.totalorder %s20, 1
      %p38 = por %p36, %p37
      %p39 = scmp.ne.s32.totalorder %s28, %s29
      %p40 = scmp.eq.s32.totalorder %s20, 0
      %p41 = por %p39, %p40
      %p42 = scmp.ne.s32.totalorder %s28, %s29
      %p43 = scmp.eq.s32.totalorder %s21, 1
      %p44 = por %p42, %p43
      %p46 = scmp.ne.s32.totalorder %s29, %s45
      %p47 = scmp.eq.s32.totalorder %s21, 0
      %p48 = por %p46, %p47
      %s50 = sadd.s32 %s49, 1
      %p53 = scmp.eq.s32.totalorder %s15, 1
      %p54 = scmp.ne.s32.totalorder %s49, %s51
      %p55 = scmp.eq.s32.totalorder %s15, 0
      %p56 = por %p54, %p55
      %p57 = scmp.ne.s32.totalorder %s49, %s51
      %p58 = scmp.eq.s32.totalorder %s20, 1
      %p59 = por %p57, %p58
      %p60 = scmp.ne.s32.totalorder %s51, %s52
      %p61 = scmp.eq.s32.totalorder %s20, 0
      %p62 = por %p60, %p61
      %p63 = scmp.ne.s32.totalorder %s51, %s52
      %p64 = scmp.eq.s32.totalorder %s21, 1
      %p65 = por %p63, %p64
      %p67 = scmp.ne.s32.totalorder %s52, %s66
      %p68 = scmp.eq.s32.totalorder %s21, 0
      %p69 = por %p67, %p68
      %s71 = sadd.s32 %s70, 1
      %p74 = scmp.eq.s32.totalorder %s15, 1
      %p75 = scmp.ne.s32.totalorder %s70, %s72
      %p76 = scmp.eq.s32.totalorder %s15, 0
      %p77 = por %p75, %p76
      %p78 = scmp.ne.s32.totalorder %s70, %s72
      %p79 = scmp.eq.s32.totalorder %s20, 1
      %p80 = por %p78, %p79
      %p81 = scmp.ne.s32.totalorder %s72, %s73
      %p82 = scmp.eq.s32.totalorder %s20, 0
      %p83 = por %p81, %p82
      %p84 = scmp.ne.s32.totalorder %s72, %s73
      %p85 = scmp.eq.s32.totalorder %s21, 1
      %p86 = por %p84, %p85
      %p88 = scmp.ne.s32.totalorder %s73, %s87
      %p89 = scmp.eq.s32.totalorder %s21, 0
      %p90 = por %p88, %p89
      %s92 = sadd.s32 %s91, 1
      %p95 = scmp.eq.s32.totalorder %s15, 1
      %p96 = scmp.ne.s32.totalorder %s91, %s93
      %p97 = scmp.eq.s32.totalorder %s15, 0
      %p98 = por %p96, %p97
      %p99 = scmp.ne.s32.totalorder %s91, %s93
      %p100 = scmp.eq.s32.totalorder %s20, 1
      %p101 = por %p99, %p100
      %p102 = scmp.ne.s32.totalorder %s93, %s94
      %p103 = scmp.eq.s32.totalorder %s20, 0
      %p104 = por %p102, %p103
      %p105 = scmp.ne.s32.totalorder %s93, %s94
      %p106 = scmp.eq.s32.totalorder %s21, 1
      %p107 = por %p105, %p106
      %p109 = scmp.ne.s32.totalorder %s94, %s108
      %p110 = scmp.eq.s32.totalorder %s21, 0
      %p111 = por %p109, %p110
      %s112 = ssub.s32 %s15, %s22
      %p113 = scmp.eq.s32.totalorder %s112, 0
      %s115 = sadd.s32 %s114, 1
      %s116 = scalar_select %p113, %s114, %s115
      %p119 = pneg %p113
      %p120 = scmp.eq.s32.totalorder %s15, 1
      %p121 = por %p119, %p120
      %p122 = scmp.ne.s32.totalorder %s114, %s117
      %p123 = scmp.eq.s32.totalorder %s15, 0
      %p124 = por %p122, %p123
      %p125 = scmp.ne.s32.totalorder %s114, %s117
      %p126 = scmp.eq.s32.totalorder %s20, 1
      %p127 = por %p125, %p126
      %p128 = scmp.ne.s32.totalorder %s117, %s118
      %p129 = scmp.eq.s32.totalorder %s20, 0
      %p130 = por %p128, %p129
      %p131 = scmp.ne.s32.totalorder %s117, %s118
      %p132 = scmp.eq.s32.totalorder %s21, 1
      %p133 = por %p131, %p132
      %p135 = scmp.ne.s32.totalorder %s118, %s134
      %p136 = scmp.eq.s32.totalorder %s21, 0
      %p137 = por %p135, %p136
      %p138 = scmp.le.s32.totalorder 1, %s15
      %p139 = scmp.lt.s32.totalorder %s15, 3
      %p140 = pnand %p138, %p139
      %p141 = pneg %p140
      // Predicated region
      $region9: #{tpu_custom_call.1} parent=5 // pred_check
        _
      $region10: #{tpu_custom_call.1} parent=5 // pred_check_branch
        %143 = sbr.rel (%p140) target = $region12
      $region11: #{tpu_custom_call.1} parent=5 // pred_region
        %s144 = ssub.s32 %s15, 1
        // Predicated region
        $region13: #{tpu_custom_call.1} parent=11 // pred_check
          %p145 = pneg %p62
        $region14: #{tpu_custom_call.1} parent=11 // pred_check_branch
          %147 = sbr.rel (%p145) target = $region16
        $region15: #{tpu_custom_call.1} parent=11 // pred_region
          %149 = vsyncadd [#allocation3], 0
          %s150 = sshll.u32 %s1, 4
          %s151 = int_to_ptr.hbm [resolvable:$true] %s150
          %s152 = sshll.u32 [#allocation2], 4
          %s153 = int_to_ptr.vmem [resolvable:$true] %s152
          %158 = dma.hbm_to_vmem [thread:$0]  %s151, 1536, %s153, [#allocation3], 64, 64, 4
        $region16: #{tpu_custom_call.1} parent=11 // pred_fallthru
          _
        // Predicated region
        $region17: #{tpu_custom_call.1} parent=11 // pred_check
          %p159 = pneg %p83
        $region18: #{tpu_custom_call.1} parent=11 // pred_check_branch
          %161 = sbr.rel (%p159) target = $region20
        $region19: #{tpu_custom_call.1} parent=11 // pred_region
          _
        $region20: #{tpu_custom_call.1} parent=11 // pred_fallthru
          _
        // Predicated region
        $region21: #{tpu_custom_call.1} parent=11 // pred_check
          %p162 = pneg %p104
        $region22: #{tpu_custom_call.1} parent=11 // pred_check_branch
          %164 = sbr.rel (%p162) target = $region24
        $region23: #{tpu_custom_call.1} parent=11 // pred_region
          %166 = vsyncadd [#allocation5], 0
          %s168 = sshll.u32 %s3, 4
          %s169 = int_to_ptr.vmem [resolvable:$true] %s168
          %171 = dma.vmem_to_smem %s169, 16, [#allocation6], [#allocation5]
        $region24: #{tpu_custom_call.1} parent=11 // pred_fallthru
          _
      $region12: #{tpu_custom_call.1} parent=5 // pred_fallthru
        _
      %p172 = scmp.lt.s32.totalorder %s15, 2
      // Predicated region
      $region25: #{tpu_custom_call.1} parent=5 // pred_check
        %p173 = pneg %p172
      $region26: #{tpu_custom_call.1} parent=5 // pred_check_branch
        %175 = sbr.rel (%p173) target = $region28
      $region27: #{tpu_custom_call.1} parent=5 // pred_region
        // Predicated region
        $region29: #{tpu_custom_call.1} parent=27 // pred_check
          %p176 = pneg %p35
        $region30: #{tpu_custom_call.1} parent=27 // pred_check_branch
          %178 = sbr.rel (%p176) target = $region32
        $region31: #{tpu_custom_call.1} parent=27 // pred_region
          %p179 = scmp.lt.s32.totalorder %s15, 1
          %s180 = scalar_select %p179, %s15, 1
          %s181 = smul.addr %s180, 3
          %s182 = smul.addr %s181, 4
          %s183 = scalar_lea.vmem %s0, %s182
        $region32: #{tpu_custom_call.1} parent=27 // pred_fallthru
          _
      $region28: #{tpu_custom_call.1} parent=5 // pred_fallthru
        _
      %p184 = scmp.le.s32.totalorder 1, %s15
      %p185 = scmp.lt.s32.totalorder %s15, 3
      %p186 = pnand %p184, %p185
      %p187 = pneg %p186
      // Predicated region
      $region33: #{tpu_custom_call.1} parent=5 // pred_check
        _
      $region34: #{tpu_custom_call.1} parent=5 // pred_check_branch
        %189 = sbr.rel (%p186) target = $region36
      $region35: #{tpu_custom_call.1} parent=5 // pred_region
        %s190 = ssub.s32 %s15, 1
        // Predicated region
        $region37: #{tpu_custom_call.1} parent=35 // pred_check
          %p191 = pneg %p62
        $region38: #{tpu_custom_call.1} parent=35 // pred_check_branch
          %193 = sbr.rel (%p191) target = $region40
        $region39: #{tpu_custom_call.1} parent=35 // pred_region
          %195 = dma.done [#allocation3], 1536
        $region40: #{tpu_custom_call.1} parent=35 // pred_fallthru
          _
        // Predicated region
        $region41: #{tpu_custom_call.1} parent=35 // pred_check
          %p196 = pneg %p104
        $region42: #{tpu_custom_call.1} parent=35 // pred_check_branch
          %198 = sbr.rel (%p196) target = $region44
        $region43: #{tpu_custom_call.1} parent=35 // pred_region
          %200 = dma.done [#allocation5], 16
        $region44: #{tpu_custom_call.1} parent=35 // pred_fallthru
          _
        %201 = sfence
        %p202 = scmp.lt.s32.totalorder %s20, 1
        %s203 = scalar_select %p202, %s20, 1
        %s204 = smul.addr %s203, 3
        %s205 = smul.addr %s204, 4
        %s206 = scalar_lea.vmem %s0, %s205
        %p207 = pneg %p41
        %p208 = pneg %p38
        %p209 = pneg %p62
        %p210 = pneg %p59
        %p211 = pneg %p83
        %p212 = pneg %p80
        %p213 = pneg %p104
        %p214 = pneg %p101
        %p215 = pneg %p130
        %p216 = pneg %p127
        %s217 = sand.u32 %s117, 1
        %s218 = scalar_lea.sflag [#allocation4], %s217
        %s219 = sand.u32 %s117, 1
        %s220 = smul.addr %s219, 16
        %s221 = scalar_lea.vmem [#allocation7], %s220
        %p222 = scmp.lt.s32.totalorder %s20, 1
        %s223 = scalar_select %p222, %s20, 1
        %s224 = smul.addr %s223, 3
        %s225 = smul.addr %s224, 4
        %s226 = scalar_lea.vmem %s0, %s225
        %v228 = vld [vmem:[%s226] sm:$0xf]
        %v229 = vld [vmem:[%s226 + $0x4] sm:$0xf]
        %v230 = vld [vmem:[%s226 + $0x8] sm:$0x1]
        %v233 = vunpack.c.l.b16 %v228
        %v234 = vunpack.c.l.b16 %v229
        %v235 = vpack.c.b16 %v234, %v233
        %v237 = vunpack.c.l.b16 %v230
        %v238 = vpack.c.b16 %v237, %v237
        %vm239 = vsmask.f32 7424
        %v241 = vshrl.u32 %v235, 16
        %v243 = vshll.u32 %v235, 16
        %v245 = vrot.slane %v243, 1
        %v246 = vor.u32 %v241, %v245
        %v248 = vshll.u32 %v238, 16
        %v250 = vrot.slane %v248, 1
        %v251 = vsel %vm239, %v246, %v250
        %252 = vrot.lane.b32.xlu0 %v251, 64
        %v253 = vpop.permute.xlu0 %252
        %vm254 = vcmask 1046528
        %v255 = vrot.slane %v235, 1
        %v256 = vrot.slane %v238, 1
        %v257 = vsel %vm254, %v255, %v256
        %vm258 = vcmask 523264
        %v260 = vsel %vm258, %v235, %v253
        %v262 = vld [vmem:[#allocation2] sm:$0xf]
        %v263 = vld [vmem:[#allocation2 + $0x4] sm:$0xf]
        %v264 = vld [vmem:[#allocation2 + $0x8] sm:$0xf]
        %v265 = vld [vmem:[#allocation2 + $0xc] sm:$0xf]
        %v266 = vld [vmem:[#allocation2 + $0x10] sm:$0xf]
        %v267 = vld [vmem:[#allocation2 + $0x14] sm:$0xf]
        %v268 = vld [vmem:[#allocation2 + $0x18] sm:$0xf]
        %v269 = vld [vmem:[#allocation2 + $0x1c] sm:$0xf]
        %v270 = vld [vmem:[#allocation2 + $0x20] sm:$0xf]
        %v271 = vld [vmem:[#allocation2 + $0x24] sm:$0xf]
        %v272 = vld [vmem:[#allocation2 + $0x28] sm:$0xf]
        %v273 = vld [vmem:[#allocation2 + $0x2c] sm:$0xf]
        %v274 = vld [vmem:[#allocation2 + $0x30] sm:$0xf]
        %v275 = vld [vmem:[#allocation2 + $0x34] sm:$0xf]
        %v276 = vld [vmem:[#allocation2 + $0x38] sm:$0xf]
        %v277 = vld [vmem:[#allocation2 + $0x3c] sm:$0xf]
        %v278 = vld [vmem:[#allocation2 + $0x40] sm:$0xf]
        %v279 = vld [vmem:[#allocation2 + $0x44] sm:$0xf]
        %v280 = vld [vmem:[#allocation2 + $0x48] sm:$0xf]
        %v281 = vld [vmem:[#allocation2 + $0x4c] sm:$0xf]
        %v282 = vld [vmem:[#allocation2 + $0x50] sm:$0xf]
        %v283 = vld [vmem:[#allocation2 + $0x54] sm:$0xf]
        %v284 = vld [vmem:[#allocation2 + $0x58] sm:$0xf]
        %v285 = vld [vmem:[#allocation2 + $0x5c] sm:$0xf]
        %v286 = vld [vmem:[%s2] sm:$0x1]
        %v288 = vperm.slane %v286, 0
        %v314 = vunpack.c.l.b16 %v262
        %v315 = vunpack.c.l.b16 %v263
        %v316 = vunpack.c.l.b16 %v264
        %v317 = vunpack.c.l.b16 %v265
        %v318 = vunpack.c.l.b16 %v266
        %v319 = vunpack.c.l.b16 %v267
        %v320 = vunpack.c.l.b16 %v268
        %v321 = vunpack.c.l.b16 %v269
        %v322 = vunpack.c.l.b16 %v270
        %v323 = vunpack.c.l.b16 %v271
        %v324 = vunpack.c.l.b16 %v272
        %v325 = vunpack.c.l.b16 %v273
        %v326 = vunpack.c.l.b16 %v274
        %v327 = vunpack.c.l.b16 %v275
        %v328 = vunpack.c.l.b16 %v276
        %v329 = vunpack.c.l.b16 %v277
        %v330 = vunpack.c.l.b16 %v278
        %v331 = vunpack.c.l.b16 %v279
        %v332 = vunpack.c.l.b16 %v280
        %v333 = vunpack.c.l.b16 %v281
        %v334 = vunpack.c.l.b16 %v282
        %v335 = vunpack.c.l.b16 %v283
        %v336 = vunpack.c.l.b16 %v284
        %v337 = vunpack.c.l.b16 %v285
        %v338 = vpack.c.b16 %v315, %v314
        %v339 = vpack.c.b16 %v317, %v316
        %v340 = vpack.c.b16 %v319, %v318
        %v341 = vpack.c.b16 %v321, %v320
        %v342 = vpack.c.b16 %v323, %v322
        %v343 = vpack.c.b16 %v325, %v324
        %v344 = vpack.c.b16 %v327, %v326
        %v345 = vpack.c.b16 %v329, %v328
        %v346 = vpack.c.b16 %v331, %v330
        %v347 = vpack.c.b16 %v333, %v332
        %v348 = vpack.c.b16 %v335, %v334
        %v349 = vpack.c.b16 %v337, %v336
        %v363 = vsel %vm258, %v257, 0
        %365 = vmatpush.bf16.msra.mxu0 %v345
        %366 = vmatpush.bf16.msra.mxu0 %v344
        %367 = vmatpush.bf16.msra.mxu0 %v343
        %368 = vmatpush.bf16.msra.mxu0 %v342
        %369 = vmatpush.bf16.msra.mxu0 %v341
        %370 = vmatpush.bf16.msra.mxu0 %v340
        %371 = vmatpush.bf16.msra.mxu0 %v339
        %372 = vmatpush.bf16.msra.mxu0 %v338
        %373 = vmatmul.bf16.gmra.mxu0 %v260
        %v374 = vpop.f32.mrf.mxu0
        %v375 = vadd.f32 %v288, %v374
        %v376 = vpop.f32.mrf.mxu0
        %v377 = vadd.f32 %v288, %v376
        %378 = vdwg.mxu0
        %379 = vmatpush.bf16.msra.mxu0 0
        %380 = vmatpush.bf16.msra.mxu0 0
        %381 = vmatpush.bf16.msra.mxu0 0
        %382 = vmatpush.bf16.msra.mxu0 0
        %383 = vmatpush.bf16.msra.mxu0 %v349
        %384 = vmatpush.bf16.msra.mxu0 %v348
        %385 = vmatpush.bf16.msra.mxu0 %v347
        %386 = vmatpush.bf16.msra.mxu0 %v346
        %387 = vmatmul.bf16.gmra.mxu0 %v363
        %v388 = vpop.f32.mrf.mxu0
        %v389 = vadd.f32 %v375, %v388
        %v390 = vpop.f32.mrf.mxu0
        %v391 = vadd.f32 %v377, %v390
        %392 = vdwg.mxu0
        %v393 = vmax.f32 %v389, 0.0
        %v394 = vmax.f32 %v391, 0.0
        %s395 = sld [smem:[#allocation6]]
        %v396 = vstv %s395
        %v397 = vmul.f32 %v396, %v393
        %v398 = vmul.f32 %v396, %v394
        %s399 = sld [smem:[#allocation6 + $0x1]]
        %v400 = vstv %s399
        %v401 = vadd.f32 %v397, %v400
        %v402 = vadd.f32 %v398, %v400
        %403 = vst [vmem:[%s221] sm:$0xff] %v401
        %404 = vst [vmem:[%s221 + $0x8] sm:$0xff] %v402
        %s405 = sand.u32 %s117, 1
        %s406 = scalar_lea.sflag [#allocation4], %s405
        %s407 = sand.u32 %s117, 1
        %s408 = smul.addr %s407, 16
        %s409 = scalar_lea.vmem [#allocation7], %s408
        // Predicated region
        $region45: #{tpu_custom_call.1} parent=35 // pred_check
          %p410 = pneg %p127
        $region46: #{tpu_custom_call.1} parent=35 // pred_check_branch
          %412 = sbr.rel (%p410) target = $region48
        $region47: #{tpu_custom_call.1} parent=35 // pred_region
          %414 = vsyncadd %s406, 0
          %s415 = smul.addr %s20, 2
          %s416 = smul.addr %s415, 8
          %s417 = scalar_lea.hbm %s4, %s416
          %s418 = sshll.u32 %s409, 4
          %s419 = int_to_ptr.vmem [resolvable:$true] %s418
          %s420 = sshll.u32 %s417, 4
          %s421 = int_to_ptr.hbm [resolvable:$true] %s420
          %426 = dma.vmem_to_hbm [thread:$0]  %s419, 256, %s421, %s406, 128, 128, 8
        $region48: #{tpu_custom_call.1} parent=35 // pred_fallthru
          _
      $region36: #{tpu_custom_call.1} parent=5 // pred_fallthru
        _
      %p427 = scmp.le.s32.totalorder 2, %s15
      // Predicated region
      $region49: #{tpu_custom_call.1} parent=5 // pred_check
        %p428 = pneg %p427
      $region50: #{tpu_custom_call.1} parent=5 // pred_check_branch
        %430 = sbr.rel (%p428) target = $region52
      $region51: #{tpu_custom_call.1} parent=5 // pred_region
        %s431 = ssub.s32 %s15, 2
        // Predicated region
        $region53: #{tpu_custom_call.1} parent=51 // pred_check
          %p432 = pneg %p133
        $region54: #{tpu_custom_call.1} parent=51 // pred_check_branch
          %434 = sbr.rel (%p432) target = $region56
        $region55: #{tpu_custom_call.1} parent=51 // pred_region
          %s435 = sand.u32 %s118, 1
          %s436 = scalar_lea.sflag [#allocation4], %s435
          %s437 = sand.u32 %s118, 1
          %s438 = smul.addr %s437, 16
          %s439 = scalar_lea.vmem [#allocation7], %s438
          %441 = dma.done %s436, 256
        $region56: #{tpu_custom_call.1} parent=51 // pred_fallthru
          _
      $region52: #{tpu_custom_call.1} parent=5 // pred_fallthru
        _
    $region6: #{tpu_custom_call.1} parent=1 // loop_footer
      %s19 = sadd.s32 1, %s15
    $region7: #{tpu_custom_call.1} parent=1 // loop_footer_branch
      %14 = sbr.rel target = $region3
    $region8: #{tpu_custom_call.1} parent=1 // loop_exit
      _
    %442 = vsyncpa [#allocation3], 1
    %s443 = scalar_lea.sflag [#allocation3], 1
    %444 = vsyncpa %s443, 1
    %445 = vsyncpa [#allocation4], 1
    %s446 = scalar_lea.sflag [#allocation4], 1
    %447 = vsyncpa %s446, 1
    %448 = vsyncpa [#allocation5], 1
    %s449 = scalar_lea.sflag [#allocation5], 1
    %450 = vsyncpa %s449, 1

</llo_original>
